<compile_context>
chip_gen: v7x
topology: tpu7x:2x2x1
jax: 0.10.0
libtpu: 0.0.40
codegen_flags: <defaults>
</compile_context>

<pallas_src>
import functools

import jax
import jax.numpy as jnp
from jax.experimental import pallas as pl
from jax.experimental.pallas import tpu as pltpu


def _dot_edge_kernel(idx_ref, s_ref, out_ref):
    # idx_ref : (2, TE) int32  — row indices in idx_ref[0], col indices in idx_ref[1]
    # s_ref   : (NU, NG) f32   — precomputed z_user @ z_game.T, VMEM-resident
    # out_ref : (1, TE) f32    — per-edge scores, lane-dense
    nu, ng = s_ref.shape
    te = out_ref.shape[1]

    idx = idx_ref[...]                  # (2, TE)
    row = idx[0:1, :]                   # (1, TE)
    col = idx[1:2, :]                   # (1, TE)

    # One-hot selectors with the edge-tile (TE) on the lane axis.
    row_oh = (jax.lax.broadcasted_iota(jnp.int32, (nu, te), 0) == row).astype(jnp.float32)
    col_oh = (jax.lax.broadcasted_iota(jnp.int32, (ng, te), 0) == col).astype(jnp.float32)

    # t[m, e] = S[row[e], m]  — exact one-hot row-select on the MXU.
    t = jax.lax.dot_general(
        s_ref[...], row_oh,
        dimension_numbers=(((0,), (0,)), ((), ())),
        preferred_element_type=jnp.float32)                      # (NG, TE)

    # out[e] = S[row[e], col[e]]  — mask with col one-hot, reduce over sublanes.
    out_ref[...] = jnp.sum(col_oh * t, axis=0, keepdims=True)    # (1, TE)


@functools.partial(jax.jit, static_argnames=("te",))
def dot_product_edge_decoder(z_user, z_game, edge_label_index, *, te=512):
    """Pallas implementation of DotProductEdgeDecoder.forward.

    z_user: (NU, D), z_game: (NG, D), edge_label_index: (2, E) int.
    Returns (E,) float32 with out[e] = <z_user[row[e]], z_game[col[e]]>.
    """
    z_user = z_user.astype(jnp.float32)
    z_game = z_game.astype(jnp.float32)
    idx = edge_label_index.astype(jnp.int32)          # (2, E)
    e = idx.shape[1]

    # Per-edge dot product is a lookup into S = U @ G^T  (small NU x NG table).
    s = jnp.dot(z_user, z_game.T, precision=jax.lax.Precision.HIGHEST)  # (NU, NG)

    e_pad = pl.cdiv(e, te) * te
    if e_pad != e:
        idx = jnp.pad(idx, ((0, 0), (0, e_pad - e)))  # padded edges -> index 0, sliced off

    out = pl.pallas_call(
        _dot_edge_kernel,
        out_shape=jax.ShapeDtypeStruct((1, e_pad), jnp.float32),
        grid_spec=pl.GridSpec(
            grid=(e_pad // te,),
            in_specs=[
                # packed row/col indices: lane-dense (2, TE) tiles
                pl.BlockSpec((2, te), lambda i: (0, i)),
                # S table: whole-array VMEM resident, no double-buffering
                pl.BlockSpec(memory_space=pltpu.MemorySpace.VMEM),
            ],
            # lane-dense (1, TE) output tiles -> unmasked vector stores
            out_specs=pl.BlockSpec((1, te), lambda i: (0, i)),
        ),
        compiler_params=pltpu.CompilerParams(
            dimension_semantics=("parallel",),
            vmem_limit_bytes=32 * 1024 * 1024,
        ),
    )(idx, s)

    return out[0, :e]


if __name__ == "__main__":
    key = jax.random.PRNGKey(0)
    k_user, k_game, k_row, k_col = jax.random.split(key, 4)

    num_users, num_games, hidden = 16, 24, 32
    num_edges = 2000  # deliberately not a multiple of the tile size

    z_user = jax.random.normal(k_user, (num_users, hidden), dtype=jnp.float32)
    z_game = jax.random.normal(k_game, (num_games, hidden), dtype=jnp.float32)
    row_idx = jax.random.randint(k_row, (num_edges,), 0, num_users, dtype=jnp.int32)
    col_idx = jax.random.randint(k_col, (num_edges,), 0, num_games, dtype=jnp.int32)
    edge_label_index = jnp.stack([row_idx, col_idx], axis=0)  # (2, E)

    out = dot_product_edge_decoder(z_user, z_game, edge_label_index)
    out = jax.block_until_ready(out)

    # Pure-JAX reference of the PyTorch forward.
    ref = jnp.sum(z_user[row_idx] * z_game[col_idx], axis=1)
    assert out.shape == (num_edges,)
    assert jnp.allclose(out, ref, atol=1e-4, rtol=1e-4), "mismatch vs reference"

    print("KERNEL_OK")
</pallas_src>

<mosaic_0001>
module attributes {stable_mosaic.version = 11 : i64} {
  func.func @_dot_edge_kernel(%arg0: i32, %arg1: memref<2x512xi32, #tpu.memory_space<vmem>>, %arg2: memref<16x24xf32, #tpu.memory_space<vmem>>, %arg3: memref<1x512xf32, #tpu.memory_space<vmem>>) attributes {dimension_semantics = [#tpu.dimension_semantics<parallel>], iteration_bounds = array<i64: 4>, scalar_prefetch = 0 : i64, scratch_operands = 0 : i64, tpu.core_type = #tpu.core_type<tc>, window_params = [{transform_indices = @transform_0, window_bounds = array<i64: 2, 512>}, {pipeline_mode = #tpu.pipeline_mode<synchronous>, transform_indices = @transform_1, window_bounds = array<i64: 16, 24>}, {transform_indices = @transform_2, window_bounds = array<i64: 1, 512>}]} {
    %c0 = arith.constant 0 : index
    %c0_0 = arith.constant 0 : index
    %0 = vector.load %arg1[%c0, %c0_0] : memref<2x512xi32, #tpu.memory_space<vmem>>, vector<2x512xi32>
    %1 = vector.extract_strided_slice %0 {offsets = [0, 0], sizes = [1, 512], strides = [1, 1]} : vector<2x512xi32> to vector<1x512xi32>
    %2 = vector.extract_strided_slice %0 {offsets = [1, 0], sizes = [1, 512], strides = [1, 1]} : vector<2x512xi32> to vector<1x512xi32>
    %3 = tpu.iota {dimensions = array<i32: 0>} : vector<16x512xi32>
    %4 = vector.broadcast %1 : vector<1x512xi32> to vector<16x512xi32>
    %5 = arith.cmpi eq, %3, %4 : vector<16x512xi32>
    %6 = arith.extui %5 : vector<16x512xi1> to vector<16x512xi32>
    %7 = arith.sitofp %6 : vector<16x512xi32> to vector<16x512xf32>
    %8 = tpu.iota {dimensions = array<i32: 0>} : vector<24x512xi32>
    %9 = vector.broadcast %2 : vector<1x512xi32> to vector<24x512xi32>
    %10 = arith.cmpi eq, %8, %9 : vector<24x512xi32>
    %11 = arith.extui %10 : vector<24x512xi1> to vector<24x512xi32>
    %12 = arith.sitofp %11 : vector<24x512xi32> to vector<24x512xf32>
    %c0_1 = arith.constant 0 : index
    %c0_2 = arith.constant 0 : index
    %13 = vector.load %arg2[%c0_1, %c0_2] : memref<16x24xf32, #tpu.memory_space<vmem>>, vector<16x24xf32>
    %cst = arith.constant dense<0.000000e+00> : vector<24x512xf32>
    %14 = tpu.matmul %13, %7, %cst {dimension_numbers = #tpu.dot_dimension_numbers<[0], [0], [1], [1], [0, 1, 1, 1], [], []>} : vector<16x24xf32>, vector<16x512xf32>, vector<24x512xf32> -> vector<24x512xf32>
    %15 = arith.mulf %12, %14 : vector<24x512xf32>
    %cst_3 = arith.constant dense<0.000000e+00> : vector<512xf32>
    %16 = vector.multi_reduction <add>, %15, %cst_3 [0] : vector<24x512xf32> to vector<512xf32>
    %17 = vector.shape_cast %16 : vector<512xf32> to vector<1x512xf32>
    %c0_4 = arith.constant 0 : index
    %c0_5 = arith.constant 0 : index
    %18 = vector.load %arg3[%c0_4, %c0_5] : memref<1x512xf32, #tpu.memory_space<vmem>>, vector<1x512xf32>
    tpu.vector_store %arg3[%c0_4, %c0_5], %17 {strides = array<i32>} : memref<1x512xf32, #tpu.memory_space<vmem>>, vector<1x512xf32>,
    return
  }
  func.func @transform_0(%arg0: i32) -> (i32, i32) {
    %c0_i32 = arith.constant 0 : i32
    %c0_i32_0 = arith.constant 0 : i32
    return %c0_i32, %arg0 : i32, i32
  }
  func.func @transform_1(%arg0: i32) -> (i32, i32) {
    %c0_i32 = arith.constant 0 : i32
    %c0_i32_0 = arith.constant 0 : i32
    %c0_i32_1 = arith.constant 0 : i32
    return %c0_i32, %c0_i32_0 : i32, i32
  }
  func.func @transform_2(%arg0: i32) -> (i32, i32) {
    %c0_i32 = arith.constant 0 : i32
    %c0_i32_0 = arith.constant 0 : i32
    return %c0_i32, %arg0 : i32, i32
  }
}

</mosaic_0001>

<llo_original>
// kernel: dot_product_edge_decoder.1
$region0: #{dot_product_edge_decoder.1}
  #allocation0 [shape = 'u32[]', space=smem, size = 0x4, offset = 0x4, fixed_abs, tag = 'smem constant byte address 0x4 - core index']
  #allocation1 [shape = 'u32[144,128]{1,0:T(1,128)}', space=vmem, size = 0x12000, scoped, tag = 'internal scratch']
  %s0 = inlined_call_operand.vmem [shape: s32[2,2048], index: 0, kind: input, shape index: {}]
  %s1 = inlined_call_operand.vmem [shape: f32[16,24], index: 1, kind: input, shape index: {}]
  %s2 = inlined_call_operand.hbm [shape: f32[1,2048], index: 2, kind: output, shape index: {}]
  %s3 = sld [smem:[#allocation0]]
  $region41: #{dot_product_edge_decoder.1} parent=0
    _
  %s5 = ssub.s32 1, %s3
  %s6 = scalar_select 0, %s5, %s3
  $region1: #{dot_product_edge_decoder.1} parent=0
    #allocation2 [shape = 'u8[4096]{0}', space=vmem, size = 0x1000, scoped, tag = 'output window, operand 0']
    #allocation3 [shape = 's32[2]{0}', space=sflag, size = 0x8, scoped, tag = 'scoped memory for dot_product_edge_decoder.1']
    %7 = vsyncpa [#allocation3], 0
    %s8 = scalar_lea.sflag [#allocation3], 1
    %9 = vsyncpa %s8, 0
    loop: start=0, step=1, limit=6
    $region2: #{dot_product_edge_decoder.1} parent=1 // loop_pre_header
      _
    $region3: #{dot_product_edge_decoder.1} parent=1 // loop_header
      %s11 = sphi 0, %s15
      %p12 = scmp.ge.s32.totalorder %s11, 6
      %s21 = sphi 0, %s23
      %s24 = sphi 0, %s21
      %s25 = sphi 0, %s24
      %s41 = sphi 0, %s25
      %s45 = sphi 0, %s45
      %s47 = sphi 0, %s45
      %s48 = sphi 0, %s47
      %s62 = sphi 0, %s48
      %s68 = sphi 0, %s70
      %s71 = sphi 0, %s68
      %s72 = sphi 0, %s71
      %s88 = sphi 0, %s72
    $region4: #{dot_product_edge_decoder.1} parent=1 // loop_header_branch
      %14 = sbr.rel (%p12) target = $region8
    $region5: #{dot_product_edge_decoder.1} parent=1 // loop_body
      %s16 = ssub.s32 %s11, 1
      %s17 = ssub.s32 %s11, 2
      %s18 = sadd.s32 %s11, 1
      %s19 = ssub.s32 %s11, %s18
      %p20 = scmp.eq.s32.totalorder %s19, 0
      %s22 = sadd.s32 %s21, 1
      %s23 = scalar_select %p20, %s21, %s22
      %p26 = pneg %p20
      %p27 = scmp.eq.s32.totalorder %s11, 3
      %p28 = por %p26, %p27
      %p29 = scmp.ne.s32.totalorder %s21, %s24
      %p30 = scmp.eq.s32.totalorder %s11, 0
      %p31 = por %p29, %p30
      %p32 = scmp.ne.s32.totalorder %s21, %s24
      %p33 = scmp.eq.s32.totalorder %s16, 3
      %p34 = por %p32, %p33
      %p35 = scmp.ne.s32.totalorder %s24, %s25
      %p36 = scmp.eq.s32.totalorder %s16, 0
      %p37 = por %p35, %p36
      %p38 = scmp.ne.s32.totalorder %s24, %s25
      %p39 = scmp.eq.s32.totalorder %s17, 3
      %p40 = por %p38, %p39
      %p42 = scmp.ne.s32.totalorder %s25, %s41
      %p43 = scmp.eq.s32.totalorder %s17, 0
      %p44 = por %p42, %p43
      %s46 = sadd.s32 %s45, 1
      %p49 = scmp.eq.s32.totalorder %s11, 3
      %p50 = scmp.ne.s32.totalorder %s45, %s47
      %p51 = scmp.eq.s32.totalorder %s11, 0
      %p52 = por %p50, %p51
      %p53 = scmp.ne.s32.totalorder %s45, %s47
      %p54 = scmp.eq.s32.totalorder %s16, 3
      %p55 = por %p53, %p54
      %p56 = scmp.ne.s32.totalorder %s47, %s48
      %p57 = scmp.eq.s32.totalorder %s16, 0
      %p58 = por %p56, %p57
      %p59 = scmp.ne.s32.totalorder %s47, %s48
      %p60 = scmp.eq.s32.totalorder %s17, 3
      %p61 = por %p59, %p60
      %p63 = scmp.ne.s32.totalorder %s48, %s62
      %p64 = scmp.eq.s32.totalorder %s17, 0
      %p65 = por %p63, %p64
      %s66 = ssub.s32 %s11, %s18
      %p67 = scmp.eq.s32.totalorder %s66, 0
      %s69 = sadd.s32 %s68, 1
      %s70 = scalar_select %p67, %s68, %s69
      %p73 = pneg %p67
      %p74 = scmp.eq.s32.totalorder %s11, 3
      %p75 = por %p73, %p74
      %p76 = scmp.ne.s32.totalorder %s68, %s71
      %p77 = scmp.eq.s32.totalorder %s11, 0
      %p78 = por %p76, %p77
      %p79 = scmp.ne.s32.totalorder %s68, %s71
      %p80 = scmp.eq.s32.totalorder %s16, 3
      %p81 = por %p79, %p80
      %p82 = scmp.ne.s32.totalorder %s71, %s72
      %p83 = scmp.eq.s32.totalorder %s16, 0
      %p84 = por %p82, %p83
      %p85 = scmp.ne.s32.totalorder %s71, %s72
      %p86 = scmp.eq.s32.totalorder %s17, 3
      %p87 = por %p85, %p86
      %p89 = scmp.ne.s32.totalorder %s72, %s88
      %p90 = scmp.eq.s32.totalorder %s17, 0
      %p91 = por %p89, %p90
      %p92 = scmp.le.s32.totalorder 1, %s11
      %p93 = scmp.lt.s32.totalorder %s11, 5
      %p94 = pnand %p92, %p93
      %p95 = pneg %p94
      // Predicated region
      $region9: #{dot_product_edge_decoder.1} parent=5 // pred_check
        _
      $region10: #{dot_product_edge_decoder.1} parent=5 // pred_check_branch
        %97 = sbr.rel (%p94) target = $region12
      $region11: #{dot_product_edge_decoder.1} parent=5 // pred_region
        %s98 = ssub.s32 %s11, 1
        // Predicated region
        $region13: #{dot_product_edge_decoder.1} parent=11 // pred_check
          %p99 = pneg %p58
        $region14: #{dot_product_edge_decoder.1} parent=11 // pred_check_branch
          %101 = sbr.rel (%p99) target = $region16
        $region15: #{dot_product_edge_decoder.1} parent=11 // pred_region
          _
        $region16: #{dot_product_edge_decoder.1} parent=11 // pred_fallthru
          _
      $region12: #{dot_product_edge_decoder.1} parent=5 // pred_fallthru
        _
      %p102 = scmp.lt.s32.totalorder %s11, 4
      // Predicated region
      $region17: #{dot_product_edge_decoder.1} parent=5 // pred_check
        %p103 = pneg %p102
      $region18: #{dot_product_edge_decoder.1} parent=5 // pred_check_branch
        %105 = sbr.rel (%p103) target = $region20
      $region19: #{dot_product_edge_decoder.1} parent=5 // pred_region
        // Predicated region
        $region21: #{dot_product_edge_decoder.1} parent=19 // pred_check
          %p106 = pneg %p31
        $region22: #{dot_product_edge_decoder.1} parent=19 // pred_check_branch
          %108 = sbr.rel (%p106) target = $region24
        $region23: #{dot_product_edge_decoder.1} parent=19 // pred_region
          %s109 = smul.u32 4, %s11
          %p110 = scmp.lt.s32.totalorder %s109, 15
          %s111 = scalar_select %p110, %s109, 15
          %s112 = smul.addr %s111, 2
          %s113 = scalar_lea.vmem %s0, %s112
          %s114 = smul.u32 4, %s11
        $region24: #{dot_product_edge_decoder.1} parent=19 // pred_fallthru
          _
      $region20: #{dot_product_edge_decoder.1} parent=5 // pred_fallthru
        _
      %p115 = scmp.le.s32.totalorder 1, %s11
      %p116 = scmp.lt.s32.totalorder %s11, 5
      %p117 = pnand %p115, %p116
      %p118 = pneg %p117
      // Predicated region
      $region25: #{dot_product_edge_decoder.1} parent=5 // pred_check
        _
      $region26: #{dot_product_edge_decoder.1} parent=5 // pred_check_branch
        %120 = sbr.rel (%p117) target = $region28
      $region27: #{dot_product_edge_decoder.1} parent=5 // pred_region
        %s121 = ssub.s32 %s11, 1
        %s122 = smul.u32 4, %s16
        %p123 = scmp.lt.s32.totalorder %s122, 15
        %s124 = scalar_select %p123, %s122, 15
        %s125 = smul.addr %s124, 2
        %s126 = scalar_lea.vmem %s0, %s125
        %p127 = pneg %p37
        %p128 = pneg %p34
        %p129 = pneg %p58
        %p130 = pneg %p55
        %p131 = pneg %p84
        %p132 = pneg %p81
        %s133 = sand.u32 %s71, 1
        %s134 = scalar_lea.sflag [#allocation3], %s133
        %s135 = sand.u32 %s71, 1
        %s136 = smul.addr %s135, 4
        %s137 = scalar_lea.vmem [#allocation2], %s136
        %s138 = smul.u32 4, %s16
        %p139 = scmp.lt.s32.totalorder %s138, 15
        %s140 = scalar_select %p139, %s138, 15
        %s141 = smul.addr %s140, 2
        %s142 = scalar_lea.vmem %s0, %s141
        %s143 = smul.u32 4, %s16
        %s144 = smul.u32 4, %s16
        %v145 = vld [vmem:[%s142] sm:$0xff]
        %v146 = vlaneseq
        %v147 = vshrl.u32 %v146, 7
        %v148 = vadd.s32 %v147, 8
        %v149 = vlaneseq
        %v150 = vshrl.u32 %v149, 7
        %v151 = vsub.s32 0, %v150
        %v152 = vrot.slane %v145, %v151
        %v153 = vlaneseq
        %v154 = vshrl.u32 %v153, 7
        %v155 = vsub.s32 2, %v154
        %v156 = vrot.slane %v145, %v155
        %v157 = vlaneseq
        %v158 = vshrl.u32 %v157, 7
        %v159 = vsub.s32 4, %v158
        %v160 = vrot.slane %v145, %v159
        %v161 = vlaneseq
        %v162 = vshrl.u32 %v161, 7
        %v163 = vsub.s32 6, %v162
        %v164 = vrot.slane %v145, %v163
        %v165 = vlaneseq
        %v166 = vshrl.u32 %v165, 7
        %v167 = vsub.s32 0, %v166
        %v168 = vrot.slane %v152, %v167
        %v169 = vlaneseq
        %v170 = vshrl.u32 %v169, 7
        %v171 = vsub.s32 0, %v170
        %v172 = vrot.slane %v156, %v171
        %v173 = vlaneseq
        %v174 = vshrl.u32 %v173, 7
        %v175 = vsub.s32 0, %v174
        %v176 = vrot.slane %v160, %v175
        %v177 = vlaneseq
        %v178 = vshrl.u32 %v177, 7
        %v179 = vsub.s32 0, %v178
        %v180 = vrot.slane %v164, %v179
        %vm181 = vcmp.eq.s32.totalorder %v147, %v168
        %vm182 = vcmp.eq.s32.totalorder %v147, %v172
        %vm183 = vcmp.eq.s32.totalorder %v147, %v176
        %vm184 = vcmp.eq.s32.totalorder %v147, %v180
        %vm185 = vcmp.eq.s32.totalorder %v148, %v168
        %vm186 = vcmp.eq.s32.totalorder %v148, %v172
        %vm187 = vcmp.eq.s32.totalorder %v148, %v176
        %vm188 = vcmp.eq.s32.totalorder %v148, %v180
        %v189 = vsel %vm181, 1, 0
        %v190 = vsel %vm182, 1, 0
        %v191 = vsel %vm183, 1, 0
        %v192 = vsel %vm184, 1, 0
        %v193 = vsel %vm185, 1, 0
        %v194 = vsel %vm186, 1, 0
        %v195 = vsel %vm187, 1, 0
        %v196 = vsel %vm188, 1, 0
        %v197 = vcvt.s32.f32 %v189
        %v198 = vcvt.s32.f32 %v190
        %v199 = vcvt.s32.f32 %v191
        %v200 = vcvt.s32.f32 %v192
        %v201 = vcvt.s32.f32 %v193
        %v202 = vcvt.s32.f32 %v194
        %v203 = vcvt.s32.f32 %v195
        %v204 = vcvt.s32.f32 %v196
        %v205 = vadd.s32 %v147, 16
        %v206 = vlaneseq
        %v207 = vshrl.u32 %v206, 7
        %v208 = vsub.s32 1, %v207
        %v209 = vrot.slane %v145, %v208
        %v210 = vlaneseq
        %v211 = vshrl.u32 %v210, 7
        %v212 = vsub.s32 3, %v211
        %v213 = vrot.slane %v145, %v212
        %v214 = vlaneseq
        %v215 = vshrl.u32 %v214, 7
        %v216 = vsub.s32 5, %v215
        %v217 = vrot.slane %v145, %v216
        %v218 = vlaneseq
        %v219 = vshrl.u32 %v218, 7
        %v220 = vsub.s32 7, %v219
        %v221 = vrot.slane %v145, %v220
        %v222 = vlaneseq
        %v223 = vshrl.u32 %v222, 7
        %v224 = vsub.s32 1, %v223
        %v225 = vrot.slane %v209, %v224
        %v226 = vlaneseq
        %v227 = vshrl.u32 %v226, 7
        %v228 = vsub.s32 1, %v227
        %v229 = vrot.slane %v213, %v228
        %v230 = vlaneseq
        %v231 = vshrl.u32 %v230, 7
        %v232 = vsub.s32 1, %v231
        %v233 = vrot.slane %v217, %v232
        %v234 = vlaneseq
        %v235 = vshrl.u32 %v234, 7
        %v236 = vsub.s32 1, %v235
        %v237 = vrot.slane %v221, %v236
        %vm238 = vcmp.eq.s32.totalorder %v147, %v225
        %vm239 = vcmp.eq.s32.totalorder %v147, %v229
        %vm240 = vcmp.eq.s32.totalorder %v147, %v233
        %vm241 = vcmp.eq.s32.totalorder %v147, %v237
        %vm242 = vcmp.eq.s32.totalorder %v148, %v225
        %vm243 = vcmp.eq.s32.totalorder %v148, %v229
        %vm244 = vcmp.eq.s32.totalorder %v148, %v233
        %vm245 = vcmp.eq.s32.totalorder %v148, %v237
        %vm246 = vcmp.eq.s32.totalorder %v205, %v225
        %vm247 = vcmp.eq.s32.totalorder %v205, %v229
        %vm248 = vcmp.eq.s32.totalorder %v205, %v233
        %vm249 = vcmp.eq.s32.totalorder %v205, %v237
        %v250 = vsel %vm238, 1, 0
        %v251 = vsel %vm239, 1, 0
        %v252 = vsel %vm240, 1, 0
        %v253 = vsel %vm241, 1, 0
        %v254 = vsel %vm242, 1, 0
        %v255 = vsel %vm243, 1, 0
        %v256 = vsel %vm244, 1, 0
        %v257 = vsel %vm245, 1, 0
        %v258 = vsel %vm246, 1, 0
        %v259 = vsel %vm247, 1, 0
        %v260 = vsel %vm248, 1, 0
        %v261 = vsel %vm249, 1, 0
        %v262 = vcvt.s32.f32 %v250
        %v263 = vcvt.s32.f32 %v251
        %v264 = vcvt.s32.f32 %v252
        %v265 = vcvt.s32.f32 %v253
        %v266 = vcvt.s32.f32 %v254
        %v267 = vcvt.s32.f32 %v255
        %v268 = vcvt.s32.f32 %v256
        %v269 = vcvt.s32.f32 %v257
        %v270 = vcvt.s32.f32 %v258
        %v271 = vcvt.s32.f32 %v259
        %v272 = vcvt.s32.f32 %v260
        %v273 = vcvt.s32.f32 %v261
        %v274 = vld [vmem:[%s1] sm:$0xff]
        %v275 = vld [vmem:[%s1 + $0x8] sm:$0xff]
        %276 = vxpose.xlu0.b32.start [1/16] %v274, 128
        %277 = vxpose.xlu0.b32.cont [2/16] %v275, 128
        %278 = vxpose.xlu0.b32.cont [3/16] 0.0, 128
        %279 = vxpose.xlu0.b32.cont [4/16] 0.0, 128
        %280 = vxpose.xlu0.b32.cont [5/16] 0.0, 128
        %281 = vxpose.xlu0.b32.cont [6/16] 0.0, 128
        %282 = vxpose.xlu0.b32.cont [7/16] 0.0, 128
        %283 = vxpose.xlu0.b32.cont [8/16] 0.0, 128
        %284 = vxpose.xlu0.b32.cont [9/16] 0.0, 128
        %285 = vxpose.xlu0.b32.cont [10/16] 0.0, 128
        %286 = vxpose.xlu0.b32.cont [11/16] 0.0, 128
        %287 = vxpose.xlu0.b32.cont [12/16] 0.0, 128
        %288 = vxpose.xlu0.b32.cont [13/16] 0.0, 128
        %289 = vxpose.xlu0.b32.cont [14/16] 0.0, 128
        %290 = vxpose.xlu0.b32.cont [15/16] 0.0, 128
        %291 = vxpose.xlu0.b32.end [16/16] 0.0, 128
        %v292 = vpop.trf.xlu0
        %v293 = vpop.trf.xlu0
        %v294 = vpop.trf.xlu0
        %v295 = vpop.trf.xlu0
        %v296 = vpop.trf.xlu0
        %v297 = vpop.trf.xlu0
        %v298 = vpop.trf.xlu0
        %v299 = vpop.trf.xlu0
        %v300 = vpop.trf.xlu0
        %v301 = vpop.trf.xlu0
        %v302 = vpop.trf.xlu0
        %v303 = vpop.trf.xlu0
        %v304 = vpop.trf.xlu0
        %v305 = vpop.trf.xlu0
        %v306 = vpop.trf.xlu0
        %v307 = vpop.trf.xlu0
        %vm308 = vcmask 130048
        %v310 = vsel %vm308, %v292, 0
        %v313 = vsel %vm308, %v293, 0
        %v316 = vsel %vm308, %v294, 0
        %318 = vmatprep.subr.mxu0 %v198
        %319 = vmatpush1.msra.mxu0 %v197
        %320 = vmatprep.subr.mxu0 %v202
        %321 = vmatpush1.msra.mxu0 %v201
        %322 = vmatprep.subr.mxu0 0.0
        %323 = vmatpush1.msra.mxu0 0.0
        %324 = vmatprep.subr.mxu0 0.0
        %325 = vmatpush1.msra.mxu0 0.0
        %326 = vmatprep.subr.mxu0 0.0
        %327 = vmatpush1.msra.mxu0 0.0
        %328 = vmatprep.subr.mxu0 0.0
        %329 = vmatpush1.msra.mxu0 0.0
        %330 = vmatprep.subr.mxu0 0.0
        %331 = vmatpush1.msra.mxu0 0.0
        %332 = vmatprep.subr.mxu0 0.0
        %333 = vmatpush1.msra.mxu0 0.0
        %334 = vmatprep.subr.mxu0 0.0
        %335 = vmatpush1.msra.mxu0 0.0
        %336 = vmatprep.subr.mxu0 0.0
        %337 = vmatpush1.msra.mxu0 0.0
        %338 = vmatprep.subr.mxu0 0.0
        %339 = vmatpush1.msra.mxu0 0.0
        %340 = vmatprep.subr.mxu0 0.0
        %341 = vmatpush1.msra.mxu0 0.0
        %342 = vmatprep.subr.mxu0 0.0
        %343 = vmatpush1.msra.mxu0 0.0
        %344 = vmatprep.subr.mxu0 0.0
        %345 = vmatpush1.msra.mxu0 0.0
        %346 = vmatprep.subr.mxu0 0.0
        %347 = vmatpush1.msra.mxu0 0.0
        %348 = vmatprep.subr.mxu0 0.0
        %349 = vmatpush1.msra.mxu0 0.0
        %350 = vmatprep.subr.mxu0 0.0
        %351 = vmatpush1.msra.mxu0 0.0
        %352 = vmatprep.subr.mxu0 0.0
        %353 = vmatpush1.msra.mxu0 0.0
        %354 = vmatprep.subr.mxu0 0.0
        %355 = vmatpush1.msra.mxu0 0.0
        %356 = vmatprep.subr.mxu0 0.0
        %357 = vmatpush1.msra.mxu0 0.0
        %358 = vmatprep.subr.mxu0 0.0
        %359 = vmatpush1.msra.mxu0 0.0
        %360 = vmatprep.subr.mxu0 0.0
        %361 = vmatpush1.msra.mxu0 0.0
        %362 = vmatprep.subr.mxu0 0.0
        %363 = vmatpush1.msra.mxu0 0.0
        %364 = vmatprep.subr.mxu0 0.0
        %365 = vmatpush1.msra.mxu0 0.0
        %366 = vmatprep.subr.mxu0 0.0
        %367 = vmatpush1.msra.mxu0 0.0
        %368 = vmatprep.subr.mxu0 0.0
        %369 = vmatpush1.msra.mxu0 0.0
        %370 = vmatprep.subr.mxu0 0.0
        %371 = vmatpush1.msra.mxu0 0.0
        %372 = vmatprep.subr.mxu0 0.0
        %373 = vmatpush1.msra.mxu0 0.0
        %374 = vmatprep.subr.mxu0 0.0
        %375 = vmatpush1.msra.mxu0 0.0
        %376 = vmatprep.subr.mxu0 0.0
        %377 = vmatpush1.msra.mxu0 0.0
        %378 = vmatprep.subr.mxu0 0.0
        %379 = vmatpush1.msra.mxu0 0.0
        %380 = vmatprep.subr.mxu0 0.0
        %381 = vmatpush1.msra.mxu0 0.0
        %382 = vmatprep.mubr.f32.mxu0 0.0
        %383 = vmatmul.mubr.f32.gmra.mrb[0].mxu0 %v310
        %v384 = vpop.f32.mrb[0].mxu0
        %v385 = vadd.f32 0.0, %v384
        %v386 = vpop.f32.mrb[0].mxu0
        %v387 = vadd.f32 0.0, %v386
        %388 = vmatprep.mubr.f32.mxu0 0.0
        %389 = vmatmul.mubr.f32.gmra.mrb[0].mxu0 %v313
        %v390 = vpop.f32.mrb[0].mxu0
        %v391 = vadd.f32 0.0, %v390
        %v392 = vpop.f32.mrb[0].mxu0
        %v393 = vadd.f32 0.0, %v392
        %394 = vmatprep.mubr.f32.mxu0 0.0
        %395 = vmatmul.mubr.f32.gmra.mrb[0].mxu0 %v316
        %v396 = vpop.f32.mrb[0].mxu0
        %v397 = vadd.f32 0.0, %v396
        %v398 = vpop.f32.mrb[0].mxu0
        %v399 = vadd.f32 0.0, %v398
        %400 = vdwg.mxu0
        %401 = vmatprep.subr.mxu0 %v200
        %402 = vmatpush1.msra.mxu0 %v199
        %403 = vmatprep.subr.mxu0 %v204
        %404 = vmatpush1.msra.mxu0 %v203
        %405 = vmatprep.subr.mxu0 0.0
        %406 = vmatpush1.msra.mxu0 0.0
        %407 = vmatprep.subr.mxu0 0.0
        %408 = vmatpush1.msra.mxu0 0.0
        %409 = vmatprep.subr.mxu0 0.0
        %410 = vmatpush1.msra.mxu0 0.0
        %411 = vmatprep.subr.mxu0 0.0
        %412 = vmatpush1.msra.mxu0 0.0
        %413 = vmatprep.subr.mxu0 0.0
        %414 = vmatpush1.msra.mxu0 0.0
        %415 = vmatprep.subr.mxu0 0.0
        %416 = vmatpush1.msra.mxu0 0.0
        %417 = vmatprep.subr.mxu0 0.0
        %418 = vmatpush1.msra.mxu0 0.0
        %419 = vmatprep.subr.mxu0 0.0
        %420 = vmatpush1.msra.mxu0 0.0
        %421 = vmatprep.subr.mxu0 0.0
        %422 = vmatpush1.msra.mxu0 0.0
        %423 = vmatprep.subr.mxu0 0.0
        %424 = vmatpush1.msra.mxu0 0.0
        %425 = vmatprep.subr.mxu0 0.0
        %426 = vmatpush1.msra.mxu0 0.0
        %427 = vmatprep.subr.mxu0 0.0
        %428 = vmatpush1.msra.mxu0 0.0
        %429 = vmatprep.subr.mxu0 0.0
        %430 = vmatpush1.msra.mxu0 0.0
        %431 = vmatprep.subr.mxu0 0.0
        %432 = vmatpush1.msra.mxu0 0.0
        %433 = vmatprep.subr.mxu0 0.0
        %434 = vmatpush1.msra.mxu0 0.0
        %435 = vmatprep.subr.mxu0 0.0
        %436 = vmatpush1.msra.mxu0 0.0
        %437 = vmatprep.subr.mxu0 0.0
        %438 = vmatpush1.msra.mxu0 0.0
        %439 = vmatprep.subr.mxu0 0.0
        %440 = vmatpush1.msra.mxu0 0.0
        %441 = vmatprep.subr.mxu0 0.0
        %442 = vmatpush1.msra.mxu0 0.0
        %443 = vmatprep.subr.mxu0 0.0
        %444 = vmatpush1.msra.mxu0 0.0
        %445 = vmatprep.subr.mxu0 0.0
        %446 = vmatpush1.msra.mxu0 0.0
        %447 = vmatprep.subr.mxu0 0.0
        %448 = vmatpush1.msra.mxu0 0.0
        %449 = vmatprep.subr.mxu0 0.0
        %450 = vmatpush1.msra.mxu0 0.0
        %451 = vmatprep.subr.mxu0 0.0
        %452 = vmatpush1.msra.mxu0 0.0
        %453 = vmatprep.subr.mxu0 0.0
        %454 = vmatpush1.msra.mxu0 0.0
        %455 = vmatprep.subr.mxu0 0.0
        %456 = vmatpush1.msra.mxu0 0.0
        %457 = vmatprep.subr.mxu0 0.0
        %458 = vmatpush1.msra.mxu0 0.0
        %459 = vmatprep.subr.mxu0 0.0
        %460 = vmatpush1.msra.mxu0 0.0
        %461 = vmatprep.subr.mxu0 0.0
        %462 = vmatpush1.msra.mxu0 0.0
        %463 = vmatprep.subr.mxu0 0.0
        %464 = vmatpush1.msra.mxu0 0.0
        %465 = vmatprep.mubr.f32.mxu0 0.0
        %466 = vmatmul.mubr.f32.gmra.mrb[0].mxu0 %v310
        %v467 = vpop.f32.mrb[0].mxu0
        %v468 = vadd.f32 0.0, %v467
        %v469 = vpop.f32.mrb[0].mxu0
        %v470 = vadd.f32 0.0, %v469
        %471 = vmatprep.mubr.f32.mxu0 0.0
        %472 = vmatmul.mubr.f32.gmra.mrb[0].mxu0 %v313
        %v473 = vpop.f32.mrb[0].mxu0
        %v474 = vadd.f32 0.0, %v473
        %v475 = vpop.f32.mrb[0].mxu0
        %v476 = vadd.f32 0.0, %v475
        %477 = vmatprep.mubr.f32.mxu0 0.0
        %478 = vmatmul.mubr.f32.gmra.mrb[0].mxu0 %v316
        %v479 = vpop.f32.mrb[0].mxu0
        %v480 = vadd.f32 0.0, %v479
        %v481 = vpop.f32.mrb[0].mxu0
        %v482 = vadd.f32 0.0, %v481
        %483 = vdwg.mxu0
        %v484 = vmul.f32 %v262, %v385
        %v485 = vmul.f32 %v263, %v387
        %v486 = vmul.f32 %v264, %v468
        %v487 = vmul.f32 %v265, %v470
        %v488 = vmul.f32 %v266, %v391
        %v489 = vmul.f32 %v267, %v393
        %v490 = vmul.f32 %v268, %v474
        %v491 = vmul.f32 %v269, %v476
        %v492 = vmul.f32 %v270, %v397
        %v493 = vmul.f32 %v271, %v399
        %v494 = vmul.f32 %v272, %v480
        %v495 = vmul.f32 %v273, %v482
        %v496 = vadd.f32 %v484, %v488
        %v497 = vadd.f32 %v496, %v492
        %v498 = vrot.slane %v497, 4
        %v499 = vadd.f32 %v497, %v498
        %v500 = vrot.slane %v499, 2
        %v501 = vadd.f32 %v499, %v500
        %v502 = vrot.slane %v501, 1
        %v503 = vadd.f32 %v501, %v502
        %v504 = vadd.f32 %v485, %v489
        %v505 = vadd.f32 %v504, %v493
        %v506 = vrot.slane %v505, 4
        %v507 = vadd.f32 %v505, %v506
        %v508 = vrot.slane %v507, 2
        %v509 = vadd.f32 %v507, %v508
        %v510 = vrot.slane %v509, 1
        %v511 = vadd.f32 %v509, %v510
        %v512 = vadd.f32 %v486, %v490
        %v513 = vadd.f32 %v512, %v494
        %v514 = vrot.slane %v513, 4
        %v515 = vadd.f32 %v513, %v514
        %v516 = vrot.slane %v515, 2
        %v517 = vadd.f32 %v515, %v516
        %v518 = vrot.slane %v517, 1
        %v519 = vadd.f32 %v517, %v518
        %v520 = vadd.f32 %v487, %v491
        %v521 = vadd.f32 %v520, %v495
        %v522 = vrot.slane %v521, 4
        %v523 = vadd.f32 %v521, %v522
        %v524 = vrot.slane %v523, 2
        %v525 = vadd.f32 %v523, %v524
        %v526 = vrot.slane %v525, 1
        %v527 = vadd.f32 %v525, %v526
        %v532 = vcombine.low %v503, %v511
        %v533 = vcombine.low %v519, %v527
        %v535 = vunpack.c.l.s4 1966171168
        %v536 = vunpack.c.0.s8 %v535
        %v537 = vlaneseq
        %v538 = vshrl.u32 %v537, 7
        %v539 = vsub.s32 %v536, %v538
        %v540 = vrot.slane %v532, %v539
        %v542 = vunpack.c.l.s4 1966171168
        %v543 = vunpack.c.0.s8 %v542
        %v544 = vlaneseq
        %v545 = vshrl.u32 %v544, 7
        %v546 = vsub.s32 %v543, %v545
        %v547 = vrot.slane %v533, %v546
        %v548 = vcombine.low %v540, %v547
        %v550 = vunpack.c.l.s4 1966171168
        %v551 = vunpack.c.0.s8 %v550
        %v552 = vlaneseq
        %v553 = vshrl.u32 %v552, 7
        %v554 = vsub.s32 %v551, %v553
        %v555 = vrot.slane %v548, %v554
        %v557 = vlaneseq
        %vm558 = vcmp.ge.s32.totalorder %v557, 0
        %vm559 = vcmp.lt.s32.totalorder %v557, 512
        %vm560 = vmand %vm558, %vm559
        %561 = vst.msk [vmem:[%s137] sm:$0xf] %vm560, %v555
        %s562 = sand.u32 %s71, 1
        %s563 = scalar_lea.sflag [#allocation3], %s562
        %s564 = sand.u32 %s71, 1
        %s565 = smul.addr %s564, 4
        %s566 = scalar_lea.vmem [#allocation2], %s565
        // Predicated region
        $region29: #{dot_product_edge_decoder.1} parent=27 // pred_check
          %p567 = pneg %p81
        $region30: #{dot_product_edge_decoder.1} parent=27 // pred_check_branch
          %569 = sbr.rel (%p567) target = $region32
        $region31: #{dot_product_edge_decoder.1} parent=27 // pred_region
          %s570 = smul.u32 4, %s16
          %s572 = ssub.s32 64, 64
          %573 = vsyncadd %s563, %s572
          %s574 = smul.addr %s570, 16
          %s575 = scalar_lea.hbm %s2, %s574
          %s577 = sshll.u32 %s566, 4
          %s578 = int_to_ptr.vmem [resolvable:$true] %s577
          %580 = dma.vmem_to_hbm [thread:$0]  %s578, 64, %s575, %s563
        $region32: #{dot_product_edge_decoder.1} parent=27 // pred_fallthru
          _
      $region28: #{dot_product_edge_decoder.1} parent=5 // pred_fallthru
        _
      %p581 = scmp.le.s32.totalorder 2, %s11
      // Predicated region
      $region33: #{dot_product_edge_decoder.1} parent=5 // pred_check
        %p582 = pneg %p581
      $region34: #{dot_product_edge_decoder.1} parent=5 // pred_check_branch
        %584 = sbr.rel (%p582) target = $region36
      $region35: #{dot_product_edge_decoder.1} parent=5 // pred_region
        %s585 = ssub.s32 %s11, 2
        // Predicated region
        $region37: #{dot_product_edge_decoder.1} parent=35 // pred_check
          %p586 = pneg %p87
        $region38: #{dot_product_edge_decoder.1} parent=35 // pred_check_branch
          %588 = sbr.rel (%p586) target = $region40
        $region39: #{dot_product_edge_decoder.1} parent=35 // pred_region
          %s589 = sand.u32 %s72, 1
          %s590 = scalar_lea.sflag [#allocation3], %s589
          %s591 = sand.u32 %s72, 1
          %s592 = smul.addr %s591, 4
          %s593 = scalar_lea.vmem [#allocation2], %s592
          %594 = dma.done %s590, 64
        $region40: #{dot_product_edge_decoder.1} parent=35 // pred_fallthru
          _
      $region36: #{dot_product_edge_decoder.1} parent=5 // pred_fallthru
        _
    $region6: #{dot_product_edge_decoder.1} parent=1 // loop_footer
      %s15 = sadd.s32 1, %s11
    $region7: #{dot_product_edge_decoder.1} parent=1 // loop_footer_branch
      %10 = sbr.rel target = $region3
    $region8: #{dot_product_edge_decoder.1} parent=1 // loop_exit
      _
    %595 = vsyncpa [#allocation3], 1
    %s596 = scalar_lea.sflag [#allocation3], 1
    %597 = vsyncpa %s596, 1

</llo_original>
